<compile_context>
chip_gen: v5e
topology: v5e:2x2
jax: 0.10.0
libtpu: 0.0.40
codegen_flags: <defaults>
</compile_context>

<pallas_src>
import jax
import jax.numpy as jnp
from jax.experimental import pallas as pl
from jax.experimental.pallas import tpu as pltpu

# logical model dims (from the PyTorch module __init__)
D_IN, D_H1, D_H2, D_OUT = 3, 10, 5, 1

# hidden dims padded to one full tile (VMEM-resident, never HBM-heavy)
PAD_H1, PAD_H2 = 128, 128

# batch rows per grid step (multiple of 128; sized for v7x's 64 MiB VMEM)
TILE_B = 8192


def _round_up(x, m):
    return ((x + m - 1) // m) * m


def _choose_tile(B):
    """Tile size (multiple of 128). Ensures >=2 grid steps for larger batches
    so dimension_semantics=("parallel",) actually feeds both v7x TensorCores."""
    bp0 = _round_up(max(B, 1), 128)
    if bp0 <= 128:
        return 128
    half = _round_up((bp0 + 1) // 2, 128)
    return min(TILE_B, half)


def mlp_kernel(x_ref, w1t_ref, b1_ref, w2t_ref, b2_ref, w3c_ref, b3_ref, o_ref):
    xT = x_ref[...]                       # (3, tb)  f32, feature-major
    w1t = w1t_ref[...]                    # (128, 3) f32

    # fc1 + ReLU: K=3 is far too small for the MXU -> 3 VPU outer-product
    # accumulates producing h1 in (hidden=128 sublanes, batch=tb lanes).
    h1 = (w1t[:, 0:1] * xT[0:1, :]
          + w1t[:, 1:2] * xT[1:2, :]
          + w1t[:, 2:3] * xT[2:3, :]
          + b1_ref[...])                  # (128, tb)
    h1 = jnp.maximum(h1, 0.0)

    # fc2 + ReLU: bf16 MXU matmul (128,128)@(128,tb), f32 accumulation.
    h2 = jnp.dot(w2t_ref[...], h1.astype(jnp.bfloat16),
                 preferred_element_type=jnp.float32) + b2_ref[...]
    h2 = jnp.maximum(h2, 0.0)             # (128, tb) f32

    # fc3 + Sigmoid: N=1 -> multiply by the w3 column and reduce over the
    # hidden (sublane) axis; sigmoid(z) = 0.5*(tanh(z/2)+1) (single EUP op,
    # numerically safe for large |z|).
    z = jnp.sum(h2 * w3c_ref[...], axis=0, keepdims=True) + b3_ref[0]   # (1, tb)
    o_ref[...] = 0.5 * (jnp.tanh(0.5 * z) + 1.0)


@jax.jit
def simple_surfer_ai(x, padded_params):
    """x: (B, 3) float32 -> (B, 1) float32. padded_params from pad_params()."""
    w1tp, b1p, w2tp, b2p, w3cp, b3p = padded_params
    B = x.shape[0]

    tb = _choose_tile(B)
    Bp = _round_up(B, tb)

    # Feature-major, lane-dense input slab: (3, Bp). Zero-padded batch columns
    # flow through harmlessly and are sliced off at the end.
    xT = x.T
    if Bp != B:
        xT = jnp.pad(xT, ((0, 0), (0, Bp - B)))

    cost = pl.CostEstimate(
        flops=int(Bp) * 2 * (D_IN * D_H1 + D_H1 * D_H2 + D_H2 * D_OUT),
        transcendentals=int(Bp),
        bytes_accessed=int(Bp) * (D_IN + D_OUT) * 4
        + 4 * (PAD_H1 * D_IN + PAD_H1 + PAD_H2 + PAD_H2 + 1)
        + 2 * PAD_H2 * PAD_H1,
    )

    out = pl.pallas_call(
        mlp_kernel,
        out_shape=jax.ShapeDtypeStruct((D_OUT, Bp), jnp.float32),
        grid=(Bp // tb,),
        in_specs=[
            pl.BlockSpec((D_IN, tb), lambda i: (0, i)),          # x: batch-tiled, lane-dense
            pl.BlockSpec((PAD_H1, D_IN), lambda i: (0, 0)),      # w1^T: resident
            pl.BlockSpec((PAD_H1, 1), lambda i: (0, 0)),         # b1 (sublane column)
            pl.BlockSpec((PAD_H2, PAD_H1), lambda i: (0, 0)),    # w2^T (bf16): resident
            pl.BlockSpec((PAD_H2, 1), lambda i: (0, 0)),         # b2
            pl.BlockSpec((PAD_H2, 1), lambda i: (0, 0)),         # w3 column
            pl.BlockSpec(memory_space=pltpu.MemorySpace.SMEM),   # b3 scalar in SMEM
        ],
        out_specs=pl.BlockSpec((D_OUT, tb), lambda i: (0, i)),   # lane-dense output
        compiler_params=pltpu.CompilerParams(
            dimension_semantics=("parallel",)),                  # v7x: shard over 2 TCs
        cost_estimate=cost,
    )(xT, w1tp, b1p, w2tp, b2p, w3cp, b3p)

    return out[0, :B].reshape(B, D_OUT)


def pad_params(params):
    """Pad / transpose / cast weights once, outside the jitted hot path."""
    w1, b1, w2, b2, w3, b3 = params
    # fc1: (128, 3) f32, hidden on the sublane axis
    w1tp = jnp.zeros((PAD_H1, D_IN), jnp.float32).at[:D_H1, :].set(w1.T)
    b1p = jnp.zeros((PAD_H1, 1), jnp.float32).at[:D_H1, 0].set(b1)
    # fc2: transposed (out, in) = (128, 128), pre-cast to bf16 for the MXU
    w2tp = (jnp.zeros((PAD_H2, PAD_H1), jnp.float32)
            .at[:D_H2, :D_H1].set(w2.T)).astype(jnp.bfloat16)
    b2p = jnp.zeros((PAD_H2, 1), jnp.float32).at[:D_H2, 0].set(b2)
    # fc3: weight column on the sublane axis, bias as an SMEM scalar
    w3cp = jnp.zeros((PAD_H2, 1), jnp.float32).at[:D_H2, 0].set(w3[:, 0])
    b3p = jnp.asarray(b3, jnp.float32).reshape((1,))
    return (w1tp, b1p, w2tp, b2p, w3cp, b3p)


def init_params(key):
    """Deterministic init matching PyTorch Linear shapes (stored as (in, out))."""
    ks = jax.random.split(key, 6)

    def u(k, shape, fan_in):
        bound = 1.0 / jnp.sqrt(float(fan_in))
        return jax.random.uniform(k, shape, jnp.float32, -bound, bound)

    w1 = u(ks[0], (D_IN, D_H1), D_IN)
    b1 = u(ks[1], (D_H1,), D_IN)
    w2 = u(ks[2], (D_H1, D_H2), D_H1)
    b2 = u(ks[3], (D_H2,), D_H1)
    w3 = u(ks[4], (D_H2, D_OUT), D_H2)
    b3 = u(ks[5], (D_OUT,), D_H2)
    return (w1, b1, w2, b2, w3, b3)


def reference(x, params):
    w1, b1, w2, b2, w3, b3 = params
    h = jnp.maximum(x @ w1 + b1, 0.0)
    h = jnp.maximum(h @ w2 + b2, 0.0)
    return jax.nn.sigmoid(h @ w3 + b3)


if __name__ == "__main__":
    key = jax.random.PRNGKey(0)
    k_x, k_p = jax.random.split(key)
    params = init_params(k_p)
    padded = pad_params(params)

    # small batch of "wave condition" feature vectors: (batch=8, features=3)
    x = jax.random.uniform(k_x, (8, D_IN), jnp.float32)
    y = jax.block_until_ready(simple_surfer_ai(x, padded))
    y_ref = reference(x, params)
    assert y.shape == (8, D_OUT)
    # tolerance relaxed slightly: fc2 runs in bf16 (f32 accumulation)
    assert jnp.allclose(y, y_ref, atol=2e-2, rtol=2e-2)

    # ragged batch (exercises the column-padding / slice-off path)
    x2 = jax.random.uniform(jax.random.PRNGKey(1), (5, D_IN), jnp.float32)
    y2 = jax.block_until_ready(simple_surfer_ai(x2, padded))
    assert y2.shape == (5, D_OUT)
    assert jnp.allclose(y2, reference(x2, params), atol=2e-2, rtol=2e-2)

    print("KERNEL_OK")
</pallas_src>

<mosaic_0001>
module attributes {stable_mosaic.version = 11 : i64} {
  func.func @mlp_kernel(%arg0: i32, %arg1: memref<3x128xf32, #tpu.memory_space<vmem>>, %arg2: memref<128x3xf32, #tpu.memory_space<vmem>>, %arg3: memref<128x1xf32, #tpu.memory_space<vmem>>, %arg4: memref<128x128xbf16, #tpu.memory_space<vmem>>, %arg5: memref<128x1xf32, #tpu.memory_space<vmem>>, %arg6: memref<128x1xf32, #tpu.memory_space<vmem>>, %arg7: memref<1xf32, #tpu.memory_space<smem>>, %arg8: memref<1x128xf32, #tpu.memory_space<vmem>>) attributes {dimension_semantics = [#tpu.dimension_semantics<parallel>], iteration_bounds = array<i64: 1>, scalar_prefetch = 0 : i64, scratch_operands = 0 : i64, tpu.core_type = #tpu.core_type<tc>, window_params = [{transform_indices = @transform_0, window_bounds = array<i64: 3, 128>}, {pipeline_mode = #tpu.pipeline_mode<synchronous>, transform_indices = @transform_1, window_bounds = array<i64: 128, 3>}, {pipeline_mode = #tpu.pipeline_mode<synchronous>, transform_indices = @transform_2, window_bounds = array<i64: 128, 1>}, {pipeline_mode = #tpu.pipeline_mode<synchronous>, transform_indices = @transform_3, window_bounds = array<i64: 128, 128>}, {pipeline_mode = #tpu.pipeline_mode<synchronous>, transform_indices = @transform_4, window_bounds = array<i64: 128, 1>}, {pipeline_mode = #tpu.pipeline_mode<synchronous>, transform_indices = @transform_5, window_bounds = array<i64: 128, 1>}, {transform_indices = @transform_6, window_bounds = array<i64: 1>}, {transform_indices = @transform_7, window_bounds = array<i64: 1, 128>}]} {
    %c0 = arith.constant 0 : index
    %c0_0 = arith.constant 0 : index
    %0 = vector.load %arg1[%c0, %c0_0] : memref<3x128xf32, #tpu.memory_space<vmem>>, vector<3x128xf32>
    %c0_1 = arith.constant 0 : index
    %c0_2 = arith.constant 0 : index
    %1 = vector.load %arg2[%c0_1, %c0_2] : memref<128x3xf32, #tpu.memory_space<vmem>>, vector<128x3xf32>
    %2 = vector.extract_strided_slice %1 {offsets = [0, 0], sizes = [128, 1], strides = [1, 1]} : vector<128x3xf32> to vector<128x1xf32>
    %3 = vector.extract_strided_slice %0 {offsets = [0, 0], sizes = [1, 128], strides = [1, 1]} : vector<3x128xf32> to vector<1x128xf32>
    %4 = vector.broadcast %2 : vector<128x1xf32> to vector<128x128xf32>
    %5 = vector.broadcast %3 : vector<1x128xf32> to vector<128x128xf32>
    %6 = arith.mulf %4, %5 : vector<128x128xf32>
    %7 = vector.extract_strided_slice %1 {offsets = [0, 1], sizes = [128, 1], strides = [1, 1]} : vector<128x3xf32> to vector<128x1xf32>
    %8 = vector.extract_strided_slice %0 {offsets = [1, 0], sizes = [1, 128], strides = [1, 1]} : vector<3x128xf32> to vector<1x128xf32>
    %9 = vector.broadcast %7 : vector<128x1xf32> to vector<128x128xf32>
    %10 = vector.broadcast %8 : vector<1x128xf32> to vector<128x128xf32>
    %11 = arith.mulf %9, %10 : vector<128x128xf32>
    %12 = arith.addf %6, %11 : vector<128x128xf32>
    %13 = vector.extract_strided_slice %1 {offsets = [0, 2], sizes = [128, 1], strides = [1, 1]} : vector<128x3xf32> to vector<128x1xf32>
    %14 = vector.extract_strided_slice %0 {offsets = [2, 0], sizes = [1, 128], strides = [1, 1]} : vector<3x128xf32> to vector<1x128xf32>
    %15 = vector.broadcast %13 : vector<128x1xf32> to vector<128x128xf32>
    %16 = vector.broadcast %14 : vector<1x128xf32> to vector<128x128xf32>
    %17 = arith.mulf %15, %16 : vector<128x128xf32>
    %18 = arith.addf %12, %17 : vector<128x128xf32>
    %c0_3 = arith.constant 0 : index
    %c0_4 = arith.constant 0 : index
    %19 = vector.load %arg3[%c0_3, %c0_4] : memref<128x1xf32, #tpu.memory_space<vmem>>, vector<128x1xf32>
    %20 = vector.broadcast %19 : vector<128x1xf32> to vector<128x128xf32>
    %21 = arith.addf %18, %20 : vector<128x128xf32>
    %cst = arith.constant 0.000000e+00 : f32
    %22 = vector.broadcast %cst : f32 to vector<128x128xf32>
    %23 = arith.maximumf %21, %22 : vector<128x128xf32>
    %c0_5 = arith.constant 0 : index
    %c0_6 = arith.constant 0 : index
    %24 = vector.load %arg4[%c0_5, %c0_6] : memref<128x128xbf16, #tpu.memory_space<vmem>>, vector<128x128xbf16>
    %25 = arith.truncf %23 : vector<128x128xf32> to vector<128x128xbf16>
    %cst_7 = arith.constant dense<0.000000e+00> : vector<128x128xf32>
    %26 = tpu.matmul %24, %25, %cst_7 {dimension_numbers = #tpu.dot_dimension_numbers<[1], [0], [0], [1], [0, 0, 1, 1], [], []>} : vector<128x128xbf16>, vector<128x128xbf16>, vector<128x128xf32> -> vector<128x128xf32>
    %c0_8 = arith.constant 0 : index
    %c0_9 = arith.constant 0 : index
    %27 = vector.load %arg5[%c0_8, %c0_9] : memref<128x1xf32, #tpu.memory_space<vmem>>, vector<128x1xf32>
    %28 = vector.broadcast %27 : vector<128x1xf32> to vector<128x128xf32>
    %29 = arith.addf %26, %28 : vector<128x128xf32>
    %cst_10 = arith.constant 0.000000e+00 : f32
    %30 = vector.broadcast %cst_10 : f32 to vector<128x128xf32>
    %31 = arith.maximumf %29, %30 : vector<128x128xf32>
    %c0_11 = arith.constant 0 : index
    %c0_12 = arith.constant 0 : index
    %32 = vector.load %arg6[%c0_11, %c0_12] : memref<128x1xf32, #tpu.memory_space<vmem>>, vector<128x1xf32>
    %33 = vector.broadcast %32 : vector<128x1xf32> to vector<128x128xf32>
    %34 = arith.mulf %31, %33 : vector<128x128xf32>
    %cst_13 = arith.constant dense<0.000000e+00> : vector<128xf32>
    %35 = vector.multi_reduction <add>, %34, %cst_13 [0] : vector<128x128xf32> to vector<128xf32>
    %36 = vector.shape_cast %35 : vector<128xf32> to vector<1x128xf32>
    %c0_14 = arith.constant 0 : index
    %37 = memref.load %arg7[%c0_14] : memref<1xf32, #tpu.memory_space<smem>>
    %38 = vector.broadcast %37 : f32 to vector<1x128xf32>
    %39 = arith.addf %36, %38 : vector<1x128xf32>
    %cst_15 = arith.constant 5.000000e-01 : f32
    %40 = vector.broadcast %cst_15 : f32 to vector<1x128xf32>
    %41 = arith.mulf %40, %39 : vector<1x128xf32>
    %42 = math.tanh %41 : vector<1x128xf32>
    %cst_16 = arith.constant 1.000000e+00 : f32
    %43 = vector.broadcast %cst_16 : f32 to vector<1x128xf32>
    %44 = arith.addf %42, %43 : vector<1x128xf32>
    %cst_17 = arith.constant 5.000000e-01 : f32
    %45 = vector.broadcast %cst_17 : f32 to vector<1x128xf32>
    %46 = arith.mulf %45, %44 : vector<1x128xf32>
    %c0_18 = arith.constant 0 : index
    %c0_19 = arith.constant 0 : index
    %47 = vector.load %arg8[%c0_18, %c0_19] : memref<1x128xf32, #tpu.memory_space<vmem>>, vector<1x128xf32>
    tpu.vector_store %arg8[%c0_18, %c0_19], %46 {strides = array<i32>} : memref<1x128xf32, #tpu.memory_space<vmem>>, vector<1x128xf32>,
    return
  }
  func.func @transform_0(%arg0: i32) -> (i32, i32) {
    %c0_i32 = arith.constant 0 : i32
    %c0_i32_0 = arith.constant 0 : i32
    return %c0_i32, %arg0 : i32, i32
  }
  func.func @transform_1(%arg0: i32) -> (i32, i32) {
    %c0_i32 = arith.constant 0 : i32
    %c0_i32_0 = arith.constant 0 : i32
    %c0_i32_1 = arith.constant 0 : i32
    return %c0_i32, %c0_i32_0 : i32, i32
  }
  func.func @transform_2(%arg0: i32) -> (i32, i32) {
    %c0_i32 = arith.constant 0 : i32
    %c0_i32_0 = arith.constant 0 : i32
    %c0_i32_1 = arith.constant 0 : i32
    return %c0_i32, %c0_i32_0 : i32, i32
  }
  func.func @transform_3(%arg0: i32) -> (i32, i32) {
    %c0_i32 = arith.constant 0 : i32
    %c0_i32_0 = arith.constant 0 : i32
    %c0_i32_1 = arith.constant 0 : i32
    return %c0_i32, %c0_i32_0 : i32, i32
  }
  func.func @transform_4(%arg0: i32) -> (i32, i32) {
    %c0_i32 = arith.constant 0 : i32
    %c0_i32_0 = arith.constant 0 : i32
    %c0_i32_1 = arith.constant 0 : i32
    return %c0_i32, %c0_i32_0 : i32, i32
  }
  func.func @transform_5(%arg0: i32) -> (i32, i32) {
    %c0_i32 = arith.constant 0 : i32
    %c0_i32_0 = arith.constant 0 : i32
    %c0_i32_1 = arith.constant 0 : i32
    return %c0_i32, %c0_i32_0 : i32, i32
  }
  func.func @transform_6(%arg0: i32) -> i32 {
    %c0_i32 = arith.constant 0 : i32
    %c0_i32_0 = arith.constant 0 : i32
    return %c0_i32 : i32
  }
  func.func @transform_7(%arg0: i32) -> (i32, i32) {
    %c0_i32 = arith.constant 0 : i32
    %c0_i32_0 = arith.constant 0 : i32
    return %c0_i32, %arg0 : i32, i32
  }
}

</mosaic_0001>

<llo_original>
// kernel: simple_surfer_ai.1
$region0: #{simple_surfer_ai.1}
  #allocation0 [shape = 'u32[]', space=smem, size = 0x4, offset = 0x4, fixed_abs, tag = 'smem constant byte address 0x4 - core index']
  #allocation1 [shape = 'u32[72,128]{1,0:T(1,128)}', space=vmem, size = 0x9000, scoped, tag = 'internal scratch']
  #allocation2 [shape = 'f32[1]{0:T(128)S(6)}', space=smem, size = 0x200, scoped, tag = 'scoped memory for simple_surfer_ai.1']
  %s0 = inlined_call_operand.vmem [shape: f32[3,128], index: 0, kind: input, shape index: {}]
  %s1 = inlined_call_operand.vmem [shape: f32[128,3], index: 1, kind: input, shape index: {}]
  %s2 = inlined_call_operand.vmem [shape: f32[128,1], index: 2, kind: input, shape index: {}]
  %s3 = inlined_call_operand.vmem [shape: bf16[128,128], index: 3, kind: input, shape index: {}]
  %s4 = inlined_call_operand.vmem [shape: f32[128,1], index: 4, kind: input, shape index: {}]
  %s5 = inlined_call_operand.vmem [shape: f32[128,1], index: 5, kind: input, shape index: {}]
  %s6 = inlined_call_operand.<no memory space> [shape: f32[1], index: 6, kind: input, shape index: {}]
  %s7 = inlined_call_operand.vmem [shape: f32[1,128], index: 7, kind: output, shape index: {}]
  %s8 = sld [smem:[#allocation0]]
  $region38: #{simple_surfer_ai.1} parent=0
    _
  %s10 = ssub.s32 1, %s8
  %s11 = scalar_select 0, %s10, %s8
  %12 = sst [smem:[#allocation2]] %s6
  // Predicated region
  $region2: #{simple_surfer_ai.1} parent=0 // pred_check
    _
  $region3: #{simple_surfer_ai.1} parent=0 // pred_check_branch
    %14 = sbr.rel (0) target = $region5
  $region4: #{simple_surfer_ai.1} parent=0 // pred_region
    _
  $region5: #{simple_surfer_ai.1} parent=0 // pred_fallthru
    _
  // Predicated region
  $region6: #{simple_surfer_ai.1} parent=0 // pred_check
    _
  $region7: #{simple_surfer_ai.1} parent=0 // pred_check_branch
    %16 = sbr.rel (0) target = $region9
  $region8: #{simple_surfer_ai.1} parent=0 // pred_region
    _
  $region9: #{simple_surfer_ai.1} parent=0 // pred_fallthru
    _
  // Predicated region
  $region10: #{simple_surfer_ai.1} parent=0 // pred_check
    _
  $region11: #{simple_surfer_ai.1} parent=0 // pred_check_branch
    %18 = sbr.rel (0) target = $region13
  $region12: #{simple_surfer_ai.1} parent=0 // pred_region
    _
  $region13: #{simple_surfer_ai.1} parent=0 // pred_fallthru
    _
  // Predicated region
  $region14: #{simple_surfer_ai.1} parent=0 // pred_check
    _
  $region15: #{simple_surfer_ai.1} parent=0 // pred_check_branch
    %20 = sbr.rel (0) target = $region17
  $region16: #{simple_surfer_ai.1} parent=0 // pred_region
    _
  $region17: #{simple_surfer_ai.1} parent=0 // pred_fallthru
    _
  // Predicated region
  $region18: #{simple_surfer_ai.1} parent=0 // pred_check
    _
  $region19: #{simple_surfer_ai.1} parent=0 // pred_check_branch
    %22 = sbr.rel (0) target = $region21
  $region20: #{simple_surfer_ai.1} parent=0 // pred_region
    _
  $region21: #{simple_surfer_ai.1} parent=0 // pred_fallthru
    _
  // Predicated region
  $region22: #{simple_surfer_ai.1} parent=0 // pred_check
    _
  $region23: #{simple_surfer_ai.1} parent=0 // pred_check_branch
    %24 = sbr.rel (0) target = $region25
  $region24: #{simple_surfer_ai.1} parent=0 // pred_region
    _
  $region25: #{simple_surfer_ai.1} parent=0 // pred_fallthru
    _
  // Predicated region
  $region26: #{simple_surfer_ai.1} parent=0 // pred_check
    _
  $region27: #{simple_surfer_ai.1} parent=0 // pred_check_branch
    %26 = sbr.rel (0) target = $region29
  $region28: #{simple_surfer_ai.1} parent=0 // pred_region
    _
  $region29: #{simple_surfer_ai.1} parent=0 // pred_fallthru
    _
  %v27 = vld [vmem:[%s0] sm:$0x7]
  %v28 = vld [vmem:[%s1] sm:$0xff]
  %v29 = vld [vmem:[%s1 + $0x8] sm:$0xff]
  %v30 = vld [vmem:[%s1 + $0x10] sm:$0xff]
  %v31 = vld [vmem:[%s1 + $0x18] sm:$0xff]
  %v32 = vld [vmem:[%s1 + $0x20] sm:$0xff]
  %v33 = vld [vmem:[%s1 + $0x28] sm:$0xff]
  %v34 = vld [vmem:[%s1 + $0x30] sm:$0xff]
  %v35 = vld [vmem:[%s1 + $0x38] sm:$0xff]
  %v36 = vld [vmem:[%s1 + $0x40] sm:$0xff]
  %v37 = vld [vmem:[%s1 + $0x48] sm:$0xff]
  %v38 = vld [vmem:[%s1 + $0x50] sm:$0xff]
  %v39 = vld [vmem:[%s1 + $0x58] sm:$0xff]
  %v40 = vld [vmem:[%s1 + $0x60] sm:$0xff]
  %v41 = vld [vmem:[%s1 + $0x68] sm:$0xff]
  %v42 = vld [vmem:[%s1 + $0x70] sm:$0xff]
  %v43 = vld [vmem:[%s1 + $0x78] sm:$0xff]
  %45 = vset.pattern.permute.xlu0 0
  %46 = vperm.xlu0 %45, %v28
  %v47 = vpop.permute.xlu0 %46
  %50 = vset.pattern.permute.xlu0 0
  %51 = vperm.xlu0 %50, %v29
  %v52 = vpop.permute.xlu0 %51
  %55 = vset.pattern.permute.xlu0 0
  %56 = vperm.xlu0 %55, %v30
  %v57 = vpop.permute.xlu0 %56
  %60 = vset.pattern.permute.xlu0 0
  %61 = vperm.xlu0 %60, %v31
  %v62 = vpop.permute.xlu0 %61
  %65 = vset.pattern.permute.xlu0 0
  %66 = vperm.xlu0 %65, %v32
  %v67 = vpop.permute.xlu0 %66
  %70 = vset.pattern.permute.xlu0 0
  %71 = vperm.xlu0 %70, %v33
  %v72 = vpop.permute.xlu0 %71
  %75 = vset.pattern.permute.xlu0 0
  %76 = vperm.xlu0 %75, %v34
  %v77 = vpop.permute.xlu0 %76
  %80 = vset.pattern.permute.xlu0 0
  %81 = vperm.xlu0 %80, %v35
  %v82 = vpop.permute.xlu0 %81
  %85 = vset.pattern.permute.xlu0 0
  %86 = vperm.xlu0 %85, %v36
  %v87 = vpop.permute.xlu0 %86
  %90 = vset.pattern.permute.xlu0 0
  %91 = vperm.xlu0 %90, %v37
  %v92 = vpop.permute.xlu0 %91
  %95 = vset.pattern.permute.xlu0 0
  %96 = vperm.xlu0 %95, %v38
  %v97 = vpop.permute.xlu0 %96
  %100 = vset.pattern.permute.xlu0 0
  %101 = vperm.xlu0 %100, %v39
  %v102 = vpop.permute.xlu0 %101
  %105 = vset.pattern.permute.xlu0 0
  %106 = vperm.xlu0 %105, %v40
  %v107 = vpop.permute.xlu0 %106
  %110 = vset.pattern.permute.xlu0 0
  %111 = vperm.xlu0 %110, %v41
  %v112 = vpop.permute.xlu0 %111
  %115 = vset.pattern.permute.xlu0 0
  %116 = vperm.xlu0 %115, %v42
  %v117 = vpop.permute.xlu0 %116
  %120 = vset.pattern.permute.xlu0 0
  %121 = vperm.xlu0 %120, %v43
  %v122 = vpop.permute.xlu0 %121
  %v124 = vperm.slane %v27, 0
  %v125 = vmul.f32 %v47, %v124
  %v126 = vmul.f32 %v52, %v124
  %v127 = vmul.f32 %v57, %v124
  %v128 = vmul.f32 %v62, %v124
  %v129 = vmul.f32 %v67, %v124
  %v130 = vmul.f32 %v72, %v124
  %v131 = vmul.f32 %v77, %v124
  %v132 = vmul.f32 %v82, %v124
  %v133 = vmul.f32 %v87, %v124
  %v134 = vmul.f32 %v92, %v124
  %v135 = vmul.f32 %v97, %v124
  %v136 = vmul.f32 %v102, %v124
  %v137 = vmul.f32 %v107, %v124
  %v138 = vmul.f32 %v112, %v124
  %v139 = vmul.f32 %v117, %v124
  %v140 = vmul.f32 %v122, %v124
  %141 = vset.pattern.permute.xlu0 1
  %142 = vperm.xlu0 %141, %v28
  %v143 = vpop.permute.xlu0 %142
  %145 = vset.pattern.permute.xlu0 1
  %146 = vperm.xlu0 %145, %v29
  %v147 = vpop.permute.xlu0 %146
  %149 = vset.pattern.permute.xlu0 1
  %150 = vperm.xlu0 %149, %v30
  %v151 = vpop.permute.xlu0 %150
  %153 = vset.pattern.permute.xlu0 1
  %154 = vperm.xlu0 %153, %v31
  %v155 = vpop.permute.xlu0 %154
  %157 = vset.pattern.permute.xlu0 1
  %158 = vperm.xlu0 %157, %v32
  %v159 = vpop.permute.xlu0 %158
  %161 = vset.pattern.permute.xlu0 1
  %162 = vperm.xlu0 %161, %v33
  %v163 = vpop.permute.xlu0 %162
  %165 = vset.pattern.permute.xlu0 1
  %166 = vperm.xlu0 %165, %v34
  %v167 = vpop.permute.xlu0 %166
  %169 = vset.pattern.permute.xlu0 1
  %170 = vperm.xlu0 %169, %v35
  %v171 = vpop.permute.xlu0 %170
  %173 = vset.pattern.permute.xlu0 1
  %174 = vperm.xlu0 %173, %v36
  %v175 = vpop.permute.xlu0 %174
  %177 = vset.pattern.permute.xlu0 1
  %178 = vperm.xlu0 %177, %v37
  %v179 = vpop.permute.xlu0 %178
  %181 = vset.pattern.permute.xlu0 1
  %182 = vperm.xlu0 %181, %v38
  %v183 = vpop.permute.xlu0 %182
  %185 = vset.pattern.permute.xlu0 1
  %186 = vperm.xlu0 %185, %v39
  %v187 = vpop.permute.xlu0 %186
  %189 = vset.pattern.permute.xlu0 1
  %190 = vperm.xlu0 %189, %v40
  %v191 = vpop.permute.xlu0 %190
  %193 = vset.pattern.permute.xlu0 1
  %194 = vperm.xlu0 %193, %v41
  %v195 = vpop.permute.xlu0 %194
  %197 = vset.pattern.permute.xlu0 1
  %198 = vperm.xlu0 %197, %v42
  %v199 = vpop.permute.xlu0 %198
  %201 = vset.pattern.permute.xlu0 1
  %202 = vperm.xlu0 %201, %v43
  %v203 = vpop.permute.xlu0 %202
  %v205 = vperm.slane %v27, 1
  %v206 = vmul.f32 %v143, %v205
  %v207 = vmul.f32 %v147, %v205
  %v208 = vmul.f32 %v151, %v205
  %v209 = vmul.f32 %v155, %v205
  %v210 = vmul.f32 %v159, %v205
  %v211 = vmul.f32 %v163, %v205
  %v212 = vmul.f32 %v167, %v205
  %v213 = vmul.f32 %v171, %v205
  %v214 = vmul.f32 %v175, %v205
  %v215 = vmul.f32 %v179, %v205
  %v216 = vmul.f32 %v183, %v205
  %v217 = vmul.f32 %v187, %v205
  %v218 = vmul.f32 %v191, %v205
  %v219 = vmul.f32 %v195, %v205
  %v220 = vmul.f32 %v199, %v205
  %v221 = vmul.f32 %v203, %v205
  %v222 = vadd.f32 %v125, %v206
  %v223 = vadd.f32 %v126, %v207
  %v224 = vadd.f32 %v127, %v208
  %v225 = vadd.f32 %v128, %v209
  %v226 = vadd.f32 %v129, %v210
  %v227 = vadd.f32 %v130, %v211
  %v228 = vadd.f32 %v131, %v212
  %v229 = vadd.f32 %v132, %v213
  %v230 = vadd.f32 %v133, %v214
  %v231 = vadd.f32 %v134, %v215
  %v232 = vadd.f32 %v135, %v216
  %v233 = vadd.f32 %v136, %v217
  %v234 = vadd.f32 %v137, %v218
  %v235 = vadd.f32 %v138, %v219
  %v236 = vadd.f32 %v139, %v220
  %v237 = vadd.f32 %v140, %v221
  %238 = vset.pattern.permute.xlu0 2
  %239 = vperm.xlu0 %238, %v28
  %v240 = vpop.permute.xlu0 %239
  %242 = vset.pattern.permute.xlu0 2
  %243 = vperm.xlu0 %242, %v29
  %v244 = vpop.permute.xlu0 %243
  %246 = vset.pattern.permute.xlu0 2
  %247 = vperm.xlu0 %246, %v30
  %v248 = vpop.permute.xlu0 %247
  %250 = vset.pattern.permute.xlu0 2
  %251 = vperm.xlu0 %250, %v31
  %v252 = vpop.permute.xlu0 %251
  %254 = vset.pattern.permute.xlu0 2
  %255 = vperm.xlu0 %254, %v32
  %v256 = vpop.permute.xlu0 %255
  %258 = vset.pattern.permute.xlu0 2
  %259 = vperm.xlu0 %258, %v33
  %v260 = vpop.permute.xlu0 %259
  %262 = vset.pattern.permute.xlu0 2
  %263 = vperm.xlu0 %262, %v34
  %v264 = vpop.permute.xlu0 %263
  %266 = vset.pattern.permute.xlu0 2
  %267 = vperm.xlu0 %266, %v35
  %v268 = vpop.permute.xlu0 %267
  %270 = vset.pattern.permute.xlu0 2
  %271 = vperm.xlu0 %270, %v36
  %v272 = vpop.permute.xlu0 %271
  %274 = vset.pattern.permute.xlu0 2
  %275 = vperm.xlu0 %274, %v37
  %v276 = vpop.permute.xlu0 %275
  %278 = vset.pattern.permute.xlu0 2
  %279 = vperm.xlu0 %278, %v38
  %v280 = vpop.permute.xlu0 %279
  %282 = vset.pattern.permute.xlu0 2
  %283 = vperm.xlu0 %282, %v39
  %v284 = vpop.permute.xlu0 %283
  %286 = vset.pattern.permute.xlu0 2
  %287 = vperm.xlu0 %286, %v40
  %v288 = vpop.permute.xlu0 %287
  %290 = vset.pattern.permute.xlu0 2
  %291 = vperm.xlu0 %290, %v41
  %v292 = vpop.permute.xlu0 %291
  %294 = vset.pattern.permute.xlu0 2
  %295 = vperm.xlu0 %294, %v42
  %v296 = vpop.permute.xlu0 %295
  %298 = vset.pattern.permute.xlu0 2
  %299 = vperm.xlu0 %298, %v43
  %v300 = vpop.permute.xlu0 %299
  %v302 = vperm.slane %v27, 2
  %v303 = vmul.f32 %v240, %v302
  %v304 = vmul.f32 %v244, %v302
  %v305 = vmul.f32 %v248, %v302
  %v306 = vmul.f32 %v252, %v302
  %v307 = vmul.f32 %v256, %v302
  %v308 = vmul.f32 %v260, %v302
  %v309 = vmul.f32 %v264, %v302
  %v310 = vmul.f32 %v268, %v302
  %v311 = vmul.f32 %v272, %v302
  %v312 = vmul.f32 %v276, %v302
  %v313 = vmul.f32 %v280, %v302
  %v314 = vmul.f32 %v284, %v302
  %v315 = vmul.f32 %v288, %v302
  %v316 = vmul.f32 %v292, %v302
  %v317 = vmul.f32 %v296, %v302
  %v318 = vmul.f32 %v300, %v302
  %v319 = vadd.f32 %v222, %v303
  %v320 = vadd.f32 %v223, %v304
  %v321 = vadd.f32 %v224, %v305
  %v322 = vadd.f32 %v225, %v306
  %v323 = vadd.f32 %v226, %v307
  %v324 = vadd.f32 %v227, %v308
  %v325 = vadd.f32 %v228, %v309
  %v326 = vadd.f32 %v229, %v310
  %v327 = vadd.f32 %v230, %v311
  %v328 = vadd.f32 %v231, %v312
  %v329 = vadd.f32 %v232, %v313
  %v330 = vadd.f32 %v233, %v314
  %v331 = vadd.f32 %v234, %v315
  %v332 = vadd.f32 %v235, %v316
  %v333 = vadd.f32 %v236, %v317
  %v334 = vadd.f32 %v237, %v318
  %v335 = vld [vmem:[%s2] sm:$0xff]
  %v336 = vld [vmem:[%s2 + $0x8] sm:$0xff]
  %v337 = vld [vmem:[%s2 + $0x10] sm:$0xff]
  %v338 = vld [vmem:[%s2 + $0x18] sm:$0xff]
  %v339 = vld [vmem:[%s2 + $0x20] sm:$0xff]
  %v340 = vld [vmem:[%s2 + $0x28] sm:$0xff]
  %v341 = vld [vmem:[%s2 + $0x30] sm:$0xff]
  %v342 = vld [vmem:[%s2 + $0x38] sm:$0xff]
  %v343 = vld [vmem:[%s2 + $0x40] sm:$0xff]
  %v344 = vld [vmem:[%s2 + $0x48] sm:$0xff]
  %v345 = vld [vmem:[%s2 + $0x50] sm:$0xff]
  %v346 = vld [vmem:[%s2 + $0x58] sm:$0xff]
  %v347 = vld [vmem:[%s2 + $0x60] sm:$0xff]
  %v348 = vld [vmem:[%s2 + $0x68] sm:$0xff]
  %v349 = vld [vmem:[%s2 + $0x70] sm:$0xff]
  %v350 = vld [vmem:[%s2 + $0x78] sm:$0xff]
  %352 = vset.pattern.permute.xlu0 0
  %353 = vperm.xlu0 %352, %v335
  %v354 = vpop.permute.xlu0 %353
  %357 = vset.pattern.permute.xlu0 0
  %358 = vperm.xlu0 %357, %v336
  %v359 = vpop.permute.xlu0 %358
  %362 = vset.pattern.permute.xlu0 0
  %363 = vperm.xlu0 %362, %v337
  %v364 = vpop.permute.xlu0 %363
  %367 = vset.pattern.permute.xlu0 0
  %368 = vperm.xlu0 %367, %v338
  %v369 = vpop.permute.xlu0 %368
  %372 = vset.pattern.permute.xlu0 0
  %373 = vperm.xlu0 %372, %v339
  %v374 = vpop.permute.xlu0 %373
  %377 = vset.pattern.permute.xlu0 0
  %378 = vperm.xlu0 %377, %v340
  %v379 = vpop.permute.xlu0 %378
  %382 = vset.pattern.permute.xlu0 0
  %383 = vperm.xlu0 %382, %v341
  %v384 = vpop.permute.xlu0 %383
  %387 = vset.pattern.permute.xlu0 0
  %388 = vperm.xlu0 %387, %v342
  %v389 = vpop.permute.xlu0 %388
  %392 = vset.pattern.permute.xlu0 0
  %393 = vperm.xlu0 %392, %v343
  %v394 = vpop.permute.xlu0 %393
  %397 = vset.pattern.permute.xlu0 0
  %398 = vperm.xlu0 %397, %v344
  %v399 = vpop.permute.xlu0 %398
  %402 = vset.pattern.permute.xlu0 0
  %403 = vperm.xlu0 %402, %v345
  %v404 = vpop.permute.xlu0 %403
  %407 = vset.pattern.permute.xlu0 0
  %408 = vperm.xlu0 %407, %v346
  %v409 = vpop.permute.xlu0 %408
  %412 = vset.pattern.permute.xlu0 0
  %413 = vperm.xlu0 %412, %v347
  %v414 = vpop.permute.xlu0 %413
  %417 = vset.pattern.permute.xlu0 0
  %418 = vperm.xlu0 %417, %v348
  %v419 = vpop.permute.xlu0 %418
  %422 = vset.pattern.permute.xlu0 0
  %423 = vperm.xlu0 %422, %v349
  %v424 = vpop.permute.xlu0 %423
  %427 = vset.pattern.permute.xlu0 0
  %428 = vperm.xlu0 %427, %v350
  %v429 = vpop.permute.xlu0 %428
  %v431 = vadd.f32 %v319, %v354
  %v432 = vadd.f32 %v320, %v359
  %v433 = vadd.f32 %v321, %v364
  %v434 = vadd.f32 %v322, %v369
  %v435 = vadd.f32 %v323, %v374
  %v436 = vadd.f32 %v324, %v379
  %v437 = vadd.f32 %v325, %v384
  %v438 = vadd.f32 %v326, %v389
  %v439 = vadd.f32 %v327, %v394
  %v440 = vadd.f32 %v328, %v399
  %v441 = vadd.f32 %v329, %v404
  %v442 = vadd.f32 %v330, %v409
  %v443 = vadd.f32 %v331, %v414
  %v444 = vadd.f32 %v332, %v419
  %v445 = vadd.f32 %v333, %v424
  %v446 = vadd.f32 %v334, %v429
  %v447 = vmax.f32 %v431, 0.0
  %v448 = vmax.f32 %v432, 0.0
  %v449 = vmax.f32 %v433, 0.0
  %v450 = vmax.f32 %v434, 0.0
  %v451 = vmax.f32 %v435, 0.0
  %v452 = vmax.f32 %v436, 0.0
  %v453 = vmax.f32 %v437, 0.0
  %v454 = vmax.f32 %v438, 0.0
  %v455 = vmax.f32 %v439, 0.0
  %v456 = vmax.f32 %v440, 0.0
  %v457 = vmax.f32 %v441, 0.0
  %v458 = vmax.f32 %v442, 0.0
  %v459 = vmax.f32 %v443, 0.0
  %v460 = vmax.f32 %v444, 0.0
  %v461 = vmax.f32 %v445, 0.0
  %v462 = vmax.f32 %v446, 0.0
  %v463 = vld [vmem:[%s3] sm:$0xf]
  %v464 = vld [vmem:[%s3 + $0x4] sm:$0xf]
  %v465 = vld [vmem:[%s3 + $0x8] sm:$0xf]
  %v466 = vld [vmem:[%s3 + $0xc] sm:$0xf]
  %v467 = vld [vmem:[%s3 + $0x10] sm:$0xf]
  %v468 = vld [vmem:[%s3 + $0x14] sm:$0xf]
  %v469 = vld [vmem:[%s3 + $0x18] sm:$0xf]
  %v470 = vld [vmem:[%s3 + $0x1c] sm:$0xf]
  %v471 = vld [vmem:[%s3 + $0x20] sm:$0xf]
  %v472 = vld [vmem:[%s3 + $0x24] sm:$0xf]
  %v473 = vld [vmem:[%s3 + $0x28] sm:$0xf]
  %v474 = vld [vmem:[%s3 + $0x2c] sm:$0xf]
  %v475 = vld [vmem:[%s3 + $0x30] sm:$0xf]
  %v476 = vld [vmem:[%s3 + $0x34] sm:$0xf]
  %v477 = vld [vmem:[%s3 + $0x38] sm:$0xf]
  %v478 = vld [vmem:[%s3 + $0x3c] sm:$0xf]
  %v479 = vpack.c.bf16 %v448, %v447
  %v480 = vpack.c.bf16 %v450, %v449
  %v481 = vpack.c.bf16 %v452, %v451
  %v482 = vpack.c.bf16 %v454, %v453
  %v483 = vpack.c.bf16 %v456, %v455
  %v484 = vpack.c.bf16 %v458, %v457
  %v485 = vpack.c.bf16 %v460, %v459
  %v486 = vpack.c.bf16 %v462, %v461
  %v487 = vld [vmem:[%s4] sm:$0xff]
  %v488 = vld [vmem:[%s4 + $0x8] sm:$0xff]
  %v489 = vld [vmem:[%s4 + $0x10] sm:$0xff]
  %v490 = vld [vmem:[%s4 + $0x18] sm:$0xff]
  %v491 = vld [vmem:[%s4 + $0x20] sm:$0xff]
  %v492 = vld [vmem:[%s4 + $0x28] sm:$0xff]
  %v493 = vld [vmem:[%s4 + $0x30] sm:$0xff]
  %v494 = vld [vmem:[%s4 + $0x38] sm:$0xff]
  %v495 = vld [vmem:[%s4 + $0x40] sm:$0xff]
  %v496 = vld [vmem:[%s4 + $0x48] sm:$0xff]
  %v497 = vld [vmem:[%s4 + $0x50] sm:$0xff]
  %v498 = vld [vmem:[%s4 + $0x58] sm:$0xff]
  %v499 = vld [vmem:[%s4 + $0x60] sm:$0xff]
  %v500 = vld [vmem:[%s4 + $0x68] sm:$0xff]
  %v501 = vld [vmem:[%s4 + $0x70] sm:$0xff]
  %v502 = vld [vmem:[%s4 + $0x78] sm:$0xff]
  %504 = vset.pattern.permute.xlu0 0
  %505 = vperm.xlu0 %504, %v487
  %v506 = vpop.permute.xlu0 %505
  %509 = vset.pattern.permute.xlu0 0
  %510 = vperm.xlu0 %509, %v488
  %v511 = vpop.permute.xlu0 %510
  %514 = vset.pattern.permute.xlu0 0
  %515 = vperm.xlu0 %514, %v489
  %v516 = vpop.permute.xlu0 %515
  %519 = vset.pattern.permute.xlu0 0
  %520 = vperm.xlu0 %519, %v490
  %v521 = vpop.permute.xlu0 %520
  %524 = vset.pattern.permute.xlu0 0
  %525 = vperm.xlu0 %524, %v491
  %v526 = vpop.permute.xlu0 %525
  %529 = vset.pattern.permute.xlu0 0
  %530 = vperm.xlu0 %529, %v492
  %v531 = vpop.permute.xlu0 %530
  %534 = vset.pattern.permute.xlu0 0
  %535 = vperm.xlu0 %534, %v493
  %v536 = vpop.permute.xlu0 %535
  %539 = vset.pattern.permute.xlu0 0
  %540 = vperm.xlu0 %539, %v494
  %v541 = vpop.permute.xlu0 %540
  %544 = vset.pattern.permute.xlu0 0
  %545 = vperm.xlu0 %544, %v495
  %v546 = vpop.permute.xlu0 %545
  %549 = vset.pattern.permute.xlu0 0
  %550 = vperm.xlu0 %549, %v496
  %v551 = vpop.permute.xlu0 %550
  %554 = vset.pattern.permute.xlu0 0
  %555 = vperm.xlu0 %554, %v497
  %v556 = vpop.permute.xlu0 %555
  %559 = vset.pattern.permute.xlu0 0
  %560 = vperm.xlu0 %559, %v498
  %v561 = vpop.permute.xlu0 %560
  %564 = vset.pattern.permute.xlu0 0
  %565 = vperm.xlu0 %564, %v499
  %v566 = vpop.permute.xlu0 %565
  %569 = vset.pattern.permute.xlu0 0
  %570 = vperm.xlu0 %569, %v500
  %v571 = vpop.permute.xlu0 %570
  %574 = vset.pattern.permute.xlu0 0
  %575 = vperm.xlu0 %574, %v501
  %v576 = vpop.permute.xlu0 %575
  %579 = vset.pattern.permute.xlu0 0
  %580 = vperm.xlu0 %579, %v502
  %v581 = vpop.permute.xlu0 %580
  %v599 = vunpack.c.l.b16 %v463
  %v600 = vunpack.c.l.b16 %v464
  %v601 = vunpack.c.l.b16 %v465
  %v602 = vunpack.c.l.b16 %v466
  %v603 = vunpack.c.l.b16 %v467
  %v604 = vunpack.c.l.b16 %v468
  %v605 = vunpack.c.l.b16 %v469
  %v606 = vunpack.c.l.b16 %v470
  %v607 = vunpack.c.l.b16 %v471
  %v608 = vunpack.c.l.b16 %v472
  %v609 = vunpack.c.l.b16 %v473
  %v610 = vunpack.c.l.b16 %v474
  %v611 = vunpack.c.l.b16 %v475
  %v612 = vunpack.c.l.b16 %v476
  %v613 = vunpack.c.l.b16 %v477
  %v614 = vunpack.c.l.b16 %v478
  %v615 = vpack.c.b16 %v600, %v599
  %v616 = vpack.c.b16 %v602, %v601
  %v617 = vpack.c.b16 %v604, %v603
  %v618 = vpack.c.b16 %v606, %v605
  %v619 = vpack.c.b16 %v608, %v607
  %v620 = vpack.c.b16 %v610, %v609
  %v621 = vpack.c.b16 %v612, %v611
  %v622 = vpack.c.b16 %v614, %v613
  %631 = vmatpush.bf16.msra.mxu0 %v486
  %632 = vmatpush.bf16.msra.mxu0 %v485
  %633 = vmatpush.bf16.msra.mxu0 %v484
  %634 = vmatpush.bf16.msra.mxu0 %v483
  %635 = vmatpush.bf16.msra.mxu0 %v482
  %636 = vmatpush.bf16.msra.mxu0 %v481
  %637 = vmatpush.bf16.msra.mxu0 %v480
  %638 = vmatpush.bf16.msra.mxu0 %v479
  %639 = vmatmul.bf16.gmra.mxu0 %v615
  %v640 = vpop.f32.mrf.mxu0
  %v641 = vadd.f32 %v506, %v640
  %v642 = vpop.f32.mrf.mxu0
  %v643 = vadd.f32 %v511, %v642
  %644 = vmatmul.bf16.gmra.mxu0 %v616
  %v645 = vpop.f32.mrf.mxu0
  %v646 = vadd.f32 %v516, %v645
  %v647 = vpop.f32.mrf.mxu0
  %v648 = vadd.f32 %v521, %v647
  %649 = vmatmul.bf16.gmra.mxu0 %v617
  %v650 = vpop.f32.mrf.mxu0
  %v651 = vadd.f32 %v526, %v650
  %v652 = vpop.f32.mrf.mxu0
  %v653 = vadd.f32 %v531, %v652
  %654 = vmatmul.bf16.gmra.mxu0 %v618
  %v655 = vpop.f32.mrf.mxu0
  %v656 = vadd.f32 %v536, %v655
  %v657 = vpop.f32.mrf.mxu0
  %v658 = vadd.f32 %v541, %v657
  %659 = vmatmul.bf16.gmra.mxu0 %v619
  %v660 = vpop.f32.mrf.mxu0
  %v661 = vadd.f32 %v546, %v660
  %v662 = vpop.f32.mrf.mxu0
  %v663 = vadd.f32 %v551, %v662
  %664 = vmatmul.bf16.gmra.mxu0 %v620
  %v665 = vpop.f32.mrf.mxu0
  %v666 = vadd.f32 %v556, %v665
  %v667 = vpop.f32.mrf.mxu0
  %v668 = vadd.f32 %v561, %v667
  %669 = vmatmul.bf16.gmra.mxu0 %v621
  %v670 = vpop.f32.mrf.mxu0
  %v671 = vadd.f32 %v566, %v670
  %v672 = vpop.f32.mrf.mxu0
  %v673 = vadd.f32 %v571, %v672
  %674 = vmatmul.bf16.gmra.mxu0 %v622
  %v675 = vpop.f32.mrf.mxu0
  %v676 = vadd.f32 %v576, %v675
  %v677 = vpop.f32.mrf.mxu0
  %v678 = vadd.f32 %v581, %v677
  %679 = vdwg.mxu0
  %v680 = vmax.f32 %v641, 0.0
  %v681 = vmax.f32 %v643, 0.0
  %v682 = vmax.f32 %v646, 0.0
  %v683 = vmax.f32 %v648, 0.0
  %v684 = vmax.f32 %v651, 0.0
  %v685 = vmax.f32 %v653, 0.0
  %v686 = vmax.f32 %v656, 0.0
  %v687 = vmax.f32 %v658, 0.0
  %v688 = vmax.f32 %v661, 0.0
  %v689 = vmax.f32 %v663, 0.0
  %v690 = vmax.f32 %v666, 0.0
  %v691 = vmax.f32 %v668, 0.0
  %v692 = vmax.f32 %v671, 0.0
  %v693 = vmax.f32 %v673, 0.0
  %v694 = vmax.f32 %v676, 0.0
  %v695 = vmax.f32 %v678, 0.0
  %v696 = vld [vmem:[%s5] sm:$0xff]
  %v697 = vld [vmem:[%s5 + $0x8] sm:$0xff]
  %v698 = vld [vmem:[%s5 + $0x10] sm:$0xff]
  %v699 = vld [vmem:[%s5 + $0x18] sm:$0xff]
  %v700 = vld [vmem:[%s5 + $0x20] sm:$0xff]
  %v701 = vld [vmem:[%s5 + $0x28] sm:$0xff]
  %v702 = vld [vmem:[%s5 + $0x30] sm:$0xff]
  %v703 = vld [vmem:[%s5 + $0x38] sm:$0xff]
  %v704 = vld [vmem:[%s5 + $0x40] sm:$0xff]
  %v705 = vld [vmem:[%s5 + $0x48] sm:$0xff]
  %v706 = vld [vmem:[%s5 + $0x50] sm:$0xff]
  %v707 = vld [vmem:[%s5 + $0x58] sm:$0xff]
  %v708 = vld [vmem:[%s5 + $0x60] sm:$0xff]
  %v709 = vld [vmem:[%s5 + $0x68] sm:$0xff]
  %v710 = vld [vmem:[%s5 + $0x70] sm:$0xff]
  %v711 = vld [vmem:[%s5 + $0x78] sm:$0xff]
  %713 = vset.pattern.permute.xlu0 0
  %714 = vperm.xlu0 %713, %v696
  %v715 = vpop.permute.xlu0 %714
  %718 = vset.pattern.permute.xlu0 0
  %719 = vperm.xlu0 %718, %v697
  %v720 = vpop.permute.xlu0 %719
  %723 = vset.pattern.permute.xlu0 0
  %724 = vperm.xlu0 %723, %v698
  %v725 = vpop.permute.xlu0 %724
  %728 = vset.pattern.permute.xlu0 0
  %729 = vperm.xlu0 %728, %v699
  %v730 = vpop.permute.xlu0 %729
  %733 = vset.pattern.permute.xlu0 0
  %734 = vperm.xlu0 %733, %v700
  %v735 = vpop.permute.xlu0 %734
  %738 = vset.pattern.permute.xlu0 0
  %739 = vperm.xlu0 %738, %v701
  %v740 = vpop.permute.xlu0 %739
  %743 = vset.pattern.permute.xlu0 0
  %744 = vperm.xlu0 %743, %v702
  %v745 = vpop.permute.xlu0 %744
  %748 = vset.pattern.permute.xlu0 0
  %749 = vperm.xlu0 %748, %v703
  %v750 = vpop.permute.xlu0 %749
  %753 = vset.pattern.permute.xlu0 0
  %754 = vperm.xlu0 %753, %v704
  %v755 = vpop.permute.xlu0 %754
  %758 = vset.pattern.permute.xlu0 0
  %759 = vperm.xlu0 %758, %v705
  %v760 = vpop.permute.xlu0 %759
  %763 = vset.pattern.permute.xlu0 0
  %764 = vperm.xlu0 %763, %v706
  %v765 = vpop.permute.xlu0 %764
  %768 = vset.pattern.permute.xlu0 0
  %769 = vperm.xlu0 %768, %v707
  %v770 = vpop.permute.xlu0 %769
  %773 = vset.pattern.permute.xlu0 0
  %774 = vperm.xlu0 %773, %v708
  %v775 = vpop.permute.xlu0 %774
  %778 = vset.pattern.permute.xlu0 0
  %779 = vperm.xlu0 %778, %v709
  %v780 = vpop.permute.xlu0 %779
  %783 = vset.pattern.permute.xlu0 0
  %784 = vperm.xlu0 %783, %v710
  %v785 = vpop.permute.xlu0 %784
  %788 = vset.pattern.permute.xlu0 0
  %789 = vperm.xlu0 %788, %v711
  %v790 = vpop.permute.xlu0 %789
  %v792 = vmul.f32 %v680, %v715
  %v793 = vmul.f32 %v681, %v720
  %v794 = vmul.f32 %v682, %v725
  %v795 = vmul.f32 %v683, %v730
  %v796 = vmul.f32 %v684, %v735
  %v797 = vmul.f32 %v685, %v740
  %v798 = vmul.f32 %v686, %v745
  %v799 = vmul.f32 %v687, %v750
  %v800 = vmul.f32 %v688, %v755
  %v801 = vmul.f32 %v689, %v760
  %v802 = vmul.f32 %v690, %v765
  %v803 = vmul.f32 %v691, %v770
  %v804 = vmul.f32 %v692, %v775
  %v805 = vmul.f32 %v693, %v780
  %v806 = vmul.f32 %v694, %v785
  %v807 = vmul.f32 %v695, %v790
  %v808 = vadd.f32 %v792, %v793
  %v809 = vadd.f32 %v808, %v794
  %v810 = vadd.f32 %v809, %v795
  %v811 = vadd.f32 %v810, %v796
  %v812 = vadd.f32 %v811, %v797
  %v813 = vadd.f32 %v812, %v798
  %v814 = vadd.f32 %v813, %v799
  %v815 = vadd.f32 %v814, %v800
  %v816 = vadd.f32 %v815, %v801
  %v817 = vadd.f32 %v816, %v802
  %v818 = vadd.f32 %v817, %v803
  %v819 = vadd.f32 %v818, %v804
  %v820 = vadd.f32 %v819, %v805
  %v821 = vadd.f32 %v820, %v806
  %v822 = vadd.f32 %v821, %v807
  %v823 = vrot.slane %v822, 4
  %v824 = vadd.f32 %v822, %v823
  %v825 = vrot.slane %v824, 2
  %v826 = vadd.f32 %v824, %v825
  %v827 = vrot.slane %v826, 1
  %v828 = vadd.f32 %v826, %v827
  %s829 = sld [smem:[#allocation2]]
  %v830 = vstv %s829
  %v831 = vadd.f32 %v828, %v830
  %v832 = vmul.f32 %v831, 0.5
  %v833 = vtanh.pop %v832
  %v834 = vadd.f32 %v833, 1.0
  %v835 = vmul.f32 %v834, 0.5
  %836 = vst [vmem:[%s7] sm:$0x1] %v835
  // Predicated region
  $region30: #{simple_surfer_ai.1} parent=0 // pred_check
    _
  $region31: #{simple_surfer_ai.1} parent=0 // pred_check_branch
    %838 = sbr.rel (0) target = $region33
  $region32: #{simple_surfer_ai.1} parent=0 // pred_region
    _
  $region33: #{simple_surfer_ai.1} parent=0 // pred_fallthru
    _
  // Predicated region
  $region34: #{simple_surfer_ai.1} parent=0 // pred_check
    _
  $region35: #{simple_surfer_ai.1} parent=0 // pred_check_branch
    %840 = sbr.rel (0) target = $region37
  $region36: #{simple_surfer_ai.1} parent=0 // pred_region
    _
  $region37: #{simple_surfer_ai.1} parent=0 // pred_fallthru
    _

</llo_original>
